<compile_context>
chip_gen: v7x
topology: tpu7x:2x2x1
jax: 0.10.0
libtpu: 0.0.40
codegen_flags: <defaults>
</compile_context>

<pallas_src>
import jax
import jax.numpy as jnp
from jax.experimental import pallas as pl
from jax.experimental.pallas import tpu as pltpu


def _round_up(n, m):
    return (n + m - 1) // m * m


def _cdiv(a, b):
    return (a + b - 1) // b


def _const_block_spec(shape):
    """BlockSpec for a grid-invariant operand: full-array block, constant index_map,
    single-buffered (no point double-buffering something whose block never changes)."""
    index_map = lambda i: (0,) * len(shape)
    try:
        return pl.BlockSpec(shape, index_map, pipeline_mode=pl.Buffered(1))
    except (AttributeError, TypeError):
        # Older jax without pipeline_mode / pl.Buffered: fall back to default buffering.
        return pl.BlockSpec(shape, index_map)


def _vmem_cap_bytes():
    """Generation-aware VMEM request cap (leave ~15% headroom for Mosaic scratch)."""
    try:
        cap = int(pltpu.get_tpu_info().vmem_capacity_bytes)
    except Exception:
        cap = 64 << 20  # conservative fallback: v7x per-TensorCore VMEM
    return max(32 << 20, int(cap * 0.85))


def _simple_fc2_kernel(x_ref, w1_ref, b1_ref, w2_ref, b2_ref, wh_ref, bh_ref, o_ref):
    # x_ref:  (tm, d_in)          w1_ref: (d_in, d_inner)       b1_ref: (1, d_inner)
    # w2_ref: (d_inner, d_inner2) b2_ref: (1, d_inner2)
    # wh_ref: (d_inner2, head_pad) bh_ref: (1, head_pad)        o_ref: (tm, head_pad)
    h = jnp.dot(x_ref[...], w1_ref[...], preferred_element_type=jnp.float32)
    h = jnp.maximum(h + b1_ref[...], 0.0)      # ReLU; dropout == identity (eval mode)
    h = h.astype(w2_ref.dtype)                 # keep the MXU on its native-dtype path

    g = jnp.dot(h, w2_ref[...], preferred_element_type=jnp.float32)
    g = jnp.maximum(g + b2_ref[...], 0.0)      # ReLU
    g = g.astype(wh_ref.dtype)

    out = jnp.dot(g, wh_ref[...], preferred_element_type=jnp.float32) + bh_ref[...]
    o_ref[...] = out.astype(o_ref.dtype)


def prepare_simple_fc2_params(w1, b1, w2, b2, wh1, bh1, wh2, bh2, wh3, bh3,
                              *, head_pad=128, weight_dtype=None):
    """One-time (model-init) parameter prep, hoisted out of the per-call path:
    fuse the three size-1 heads into a single lane-dense matmul (output padded to
    128 lanes -> unmasked vst), reshape biases, optionally cast weights to bf16."""
    assert head_pad >= 3 and head_pad % 128 == 0
    d_in, d_inner = w1.shape
    d_inner2 = w2.shape[1]

    wh = jnp.concatenate(
        [wh1.reshape(d_inner2, 1), wh2.reshape(d_inner2, 1), wh3.reshape(d_inner2, 1)],
        axis=1)
    wh_p = jnp.zeros((d_inner2, head_pad), wh.dtype).at[:, :3].set(wh)
    bh = jnp.concatenate([bh1.reshape(1), bh2.reshape(1), bh3.reshape(1)])
    bh_p = jnp.zeros((1, head_pad), bh.dtype).at[0, :3].set(bh)

    b1_2d = b1.reshape(1, d_inner)
    b2_2d = b2.reshape(1, d_inner2)

    if weight_dtype is not None:
        # bf16 weights: ~2x MXU throughput on v6e/v7x and half the resident VMEM.
        # Accumulation stays f32 via preferred_element_type in the kernel.
        # TODO(synk): loosen the test tolerance if this path is enabled.
        w1 = w1.astype(weight_dtype)
        w2 = w2.astype(weight_dtype)
        wh_p = wh_p.astype(weight_dtype)

    return (w1, b1_2d, w2, b2_2d, wh_p, bh_p)


def simple_fc2(x, params, *, tm=512):
    """x: [batch, ...] (trailing dims flattened).  params: prepare_simple_fc2_params().
    Returns (h1, h2, h3), each [batch, 1]."""
    w1, b1_2d, w2, b2_2d, wh_p, bh_p = params
    d_in, d_inner = w1.shape
    d_inner2, head_pad = wh_p.shape

    B = x.shape[0]
    x2d = x.reshape(B, d_in)

    # Row tile: round to the input dtype's native sublane packing (f32:8, bf16:16, i8:32).
    itemsize_x = jnp.dtype(x2d.dtype).itemsize
    sublane = max(8, 32 // itemsize_x)
    tm_eff = min(tm, _round_up(B, sublane))
    # Ensure >= 2 grid steps when possible so the "parallel" M axis actually splits
    # across both TensorCores on v7x.
    if _cdiv(B, tm_eff) < 2 and B > sublane:
        tm_eff = _round_up(_cdiv(B, 2), sublane)
    grid_m = _cdiv(B, tm_eff)   # last block may be partial -> no wrapper-side pad copy

    # VMEM budget: single-buffered resident weights + double-buffered x/out row tiles.
    weight_bytes = sum(int(a.size) * jnp.dtype(a.dtype).itemsize
                       for a in (w1, b1_2d, w2, b2_2d, wh_p, bh_p))
    out_itemsize = jnp.dtype(x.dtype).itemsize
    tile_bytes = 2 * tm_eff * (d_in * itemsize_x + head_pad * out_itemsize)
    vmem_limit = int(min(max(32 << 20, weight_bytes + tile_bytes + (8 << 20)),
                         _vmem_cap_bytes()))

    flops = 2 * B * (d_in * d_inner + d_inner * d_inner2 + d_inner2 * head_pad)
    bytes_accessed = B * d_in * itemsize_x + weight_bytes + B * head_pad * out_itemsize

    out2d = pl.pallas_call(
        _simple_fc2_kernel,
        out_shape=jax.ShapeDtypeStruct((B, head_pad), x.dtype),
        grid_spec=pltpu.PrefetchScalarGridSpec(
            num_scalar_prefetch=0,
            grid=(grid_m,),
            in_specs=[
                pl.BlockSpec((tm_eff, d_in), lambda i: (i, 0)),   # x row tile (pipelined)
                _const_block_spec((d_in, d_inner)),               # w1 (resident)
                _const_block_spec((1, d_inner)),                  # b1
                _const_block_spec((d_inner, d_inner2)),           # w2 (resident)
                _const_block_spec((1, d_inner2)),                 # b2
                _const_block_spec((d_inner2, head_pad)),          # fused head weights
                _const_block_spec((1, head_pad)),                 # fused head bias
            ],
            out_specs=pl.BlockSpec((tm_eff, head_pad), lambda i: (i, 0)),
        ),
        compiler_params=pltpu.CompilerParams(
            dimension_semantics=("parallel",),
            vmem_limit_bytes=vmem_limit,
        ),
        cost_estimate=pl.CostEstimate(
            flops=flops, transcendentals=0, bytes_accessed=bytes_accessed),
    )(x2d, w1, b1_2d, w2, b2_2d, wh_p, bh_p)

    return out2d[:, 0:1], out2d[:, 1:2], out2d[:, 2:3]


def _reference(x, w1, b1, w2, b2, wh1, bh1, wh2, bh2, wh3, bh3):
    x2 = x.reshape(x.shape[0], -1)
    h = jnp.maximum(x2 @ w1 + b1, 0.0)
    g = jnp.maximum(h @ w2 + b2, 0.0)
    return (g @ wh1.reshape(-1, 1) + bh1,
            g @ wh2.reshape(-1, 1) + bh2,
            g @ wh3.reshape(-1, 1) + bh3)


if __name__ == "__main__":
    # opt: n_max_seq=8, d_model=32, d_inner=64, d_inner2=64, dropout (eval -> identity)
    batch, n_max_seq, d_model = 2, 8, 32
    d_in = n_max_seq * d_model
    d_inner, d_inner2 = 64, 64

    key = jax.random.PRNGKey(0)
    kx, kw1, kb1, kw2, kb2, kh1, kc1, kh2, kc2, kh3, kc3 = jax.random.split(key, 11)

    x = jax.random.normal(kx, (batch, n_max_seq, d_model), dtype=jnp.float32)

    # PyTorch-style uniform init; weights stored pre-transposed ([in, out]).
    bound1 = 1.0 / jnp.sqrt(jnp.float32(d_in))
    bound2 = 1.0 / jnp.sqrt(jnp.float32(d_inner))
    bound3 = 1.0 / jnp.sqrt(jnp.float32(d_inner2))
    w1 = jax.random.uniform(kw1, (d_in, d_inner), jnp.float32, -bound1, bound1)
    b1 = jax.random.uniform(kb1, (d_inner,), jnp.float32, -bound1, bound1)
    w2 = jax.random.uniform(kw2, (d_inner, d_inner2), jnp.float32, -bound2, bound2)
    b2 = jax.random.uniform(kb2, (d_inner2,), jnp.float32, -bound2, bound2)
    wh1 = jax.random.uniform(kh1, (d_inner2, 1), jnp.float32, -bound3, bound3)
    bh1 = jax.random.uniform(kc1, (1,), jnp.float32, -bound3, bound3)
    wh2 = jax.random.uniform(kh2, (d_inner2, 1), jnp.float32, -bound3, bound3)
    bh2 = jax.random.uniform(kc2, (1,), jnp.float32, -bound3, bound3)
    wh3 = jax.random.uniform(kh3, (d_inner2, 1), jnp.float32, -bound3, bound3)
    bh3 = jax.random.uniform(kc3, (1,), jnp.float32, -bound3, bound3)

    # One-time (model-init) parameter prep: head fusion + bias reshape.  Pass
    # weight_dtype=jnp.bfloat16 for the fast MXU path on v6e/v7x; kept f32 here so
    # the 1e-5 comparison against the pure-f32 reference holds.
    params = prepare_simple_fc2_params(w1, b1, w2, b2, wh1, bh1, wh2, bh2, wh3, bh3)

    h1, h2, h3 = simple_fc2(x, params)
    h1, h2, h3 = jax.block_until_ready((h1, h2, h3))

    r1, r2, r3 = _reference(x, w1, b1, w2, b2, wh1, bh1, wh2, bh2, wh3, bh3)
    assert h1.shape == (batch, 1) and h2.shape == (batch, 1) and h3.shape == (batch, 1)
    assert jnp.allclose(h1, r1, atol=1e-5, rtol=1e-5), "head1 mismatch vs reference"
    assert jnp.allclose(h2, r2, atol=1e-5, rtol=1e-5), "head2 mismatch vs reference"
    assert jnp.allclose(h3, r3, atol=1e-5, rtol=1e-5), "head3 mismatch vs reference"

    print("KERNEL_OK")
</pallas_src>

<mosaic_0001>
module attributes {stable_mosaic.version = 11 : i64} {
  func.func @_simple_fc2_kernel(%arg0: i32, %arg1: memref<8x256xf32, #tpu.memory_space<vmem>>, %arg2: memref<256x64xf32, #tpu.memory_space<vmem>>, %arg3: memref<1x64xf32, #tpu.memory_space<vmem>>, %arg4: memref<64x64xf32, #tpu.memory_space<vmem>>, %arg5: memref<1x64xf32, #tpu.memory_space<vmem>>, %arg6: memref<64x128xf32, #tpu.memory_space<vmem>>, %arg7: memref<1x128xf32, #tpu.memory_space<vmem>>, %arg8: memref<8x128xf32, #tpu.memory_space<vmem>>) attributes {dimension_semantics = [#tpu.dimension_semantics<parallel>], iteration_bounds = array<i64: 1>, scalar_prefetch = 0 : i64, scratch_operands = 0 : i64, tpu.core_type = #tpu.core_type<tc>, window_params = [{transform_indices = @transform_0, window_bounds = array<i64: 8, 256>}, {pipeline_mode = #tpu.pipeline_mode<synchronous>, transform_indices = @transform_1, window_bounds = array<i64: 256, 64>}, {pipeline_mode = #tpu.pipeline_mode<synchronous>, transform_indices = @transform_2, window_bounds = array<i64: 1, 64>}, {pipeline_mode = #tpu.pipeline_mode<synchronous>, transform_indices = @transform_3, window_bounds = array<i64: 64, 64>}, {pipeline_mode = #tpu.pipeline_mode<synchronous>, transform_indices = @transform_4, window_bounds = array<i64: 1, 64>}, {pipeline_mode = #tpu.pipeline_mode<synchronous>, transform_indices = @transform_5, window_bounds = array<i64: 64, 128>}, {pipeline_mode = #tpu.pipeline_mode<synchronous>, transform_indices = @transform_6, window_bounds = array<i64: 1, 128>}, {transform_indices = @transform_7, window_bounds = array<i64: 8, 128>}]} {
    %c0 = arith.constant 0 : index
    %c0_0 = arith.constant 0 : index
    %0 = vector.load %arg1[%c0, %c0_0] : memref<8x256xf32, #tpu.memory_space<vmem>>, vector<8x256xf32>
    %c0_1 = arith.constant 0 : index
    %c0_2 = arith.constant 0 : index
    %1 = vector.load %arg2[%c0_1, %c0_2] : memref<256x64xf32, #tpu.memory_space<vmem>>, vector<256x64xf32>
    %cst = arith.constant dense<0.000000e+00> : vector<8x64xf32>
    %2 = tpu.matmul %0, %1, %cst {dimension_numbers = #tpu.dot_dimension_numbers<[1], [0], [0], [1], [0, 0, 1, 1], [], []>} : vector<8x256xf32>, vector<256x64xf32>, vector<8x64xf32> -> vector<8x64xf32>
    %c0_3 = arith.constant 0 : index
    %c0_4 = arith.constant 0 : index
    %3 = vector.load %arg3[%c0_3, %c0_4] : memref<1x64xf32, #tpu.memory_space<vmem>>, vector<1x64xf32>
    %4 = vector.broadcast %3 : vector<1x64xf32> to vector<8x64xf32>
    %5 = arith.addf %2, %4 : vector<8x64xf32>
    %cst_5 = arith.constant 0.000000e+00 : f32
    %6 = vector.broadcast %cst_5 : f32 to vector<8x64xf32>
    %7 = arith.maximumf %5, %6 : vector<8x64xf32>
    %c0_6 = arith.constant 0 : index
    %c0_7 = arith.constant 0 : index
    %8 = vector.load %arg4[%c0_6, %c0_7] : memref<64x64xf32, #tpu.memory_space<vmem>>, vector<64x64xf32>
    %cst_8 = arith.constant dense<0.000000e+00> : vector<8x64xf32>
    %9 = tpu.matmul %7, %8, %cst_8 {dimension_numbers = #tpu.dot_dimension_numbers<[1], [0], [0], [1], [0, 0, 1, 1], [], []>} : vector<8x64xf32>, vector<64x64xf32>, vector<8x64xf32> -> vector<8x64xf32>
    %c0_9 = arith.constant 0 : index
    %c0_10 = arith.constant 0 : index
    %10 = vector.load %arg5[%c0_9, %c0_10] : memref<1x64xf32, #tpu.memory_space<vmem>>, vector<1x64xf32>
    %11 = vector.broadcast %10 : vector<1x64xf32> to vector<8x64xf32>
    %12 = arith.addf %9, %11 : vector<8x64xf32>
    %cst_11 = arith.constant 0.000000e+00 : f32
    %13 = vector.broadcast %cst_11 : f32 to vector<8x64xf32>
    %14 = arith.maximumf %12, %13 : vector<8x64xf32>
    %c0_12 = arith.constant 0 : index
    %c0_13 = arith.constant 0 : index
    %15 = vector.load %arg6[%c0_12, %c0_13] : memref<64x128xf32, #tpu.memory_space<vmem>>, vector<64x128xf32>
    %cst_14 = arith.constant dense<0.000000e+00> : vector<8x128xf32>
    %16 = tpu.matmul %14, %15, %cst_14 {dimension_numbers = #tpu.dot_dimension_numbers<[1], [0], [0], [1], [0, 0, 1, 1], [], []>} : vector<8x64xf32>, vector<64x128xf32>, vector<8x128xf32> -> vector<8x128xf32>
    %c0_15 = arith.constant 0 : index
    %c0_16 = arith.constant 0 : index
    %17 = vector.load %arg7[%c0_15, %c0_16] : memref<1x128xf32, #tpu.memory_space<vmem>>, vector<1x128xf32>
    %18 = vector.broadcast %17 : vector<1x128xf32> to vector<8x128xf32>
    %19 = arith.addf %16, %18 : vector<8x128xf32>
    %c0_17 = arith.constant 0 : index
    %c0_18 = arith.constant 0 : index
    %20 = vector.load %arg8[%c0_17, %c0_18] : memref<8x128xf32, #tpu.memory_space<vmem>>, vector<8x128xf32>
    tpu.vector_store %arg8[%c0_17, %c0_18], %19 {strides = array<i32>} : memref<8x128xf32, #tpu.memory_space<vmem>>, vector<8x128xf32>,
    return
  }
  func.func @transform_0(%arg0: i32) -> (i32, i32) {
    %c0_i32 = arith.constant 0 : i32
    %c0_i32_0 = arith.constant 0 : i32
    return %arg0, %c0_i32 : i32, i32
  }
  func.func @transform_1(%arg0: i32) -> (i32, i32) {
    %c0_i32 = arith.constant 0 : i32
    %c0_i32_0 = arith.constant 0 : i32
    %c0_i32_1 = arith.constant 0 : i32
    return %c0_i32, %c0_i32_0 : i32, i32
  }
  func.func @transform_2(%arg0: i32) -> (i32, i32) {
    %c0_i32 = arith.constant 0 : i32
    %c0_i32_0 = arith.constant 0 : i32
    %c0_i32_1 = arith.constant 0 : i32
    return %c0_i32, %c0_i32_0 : i32, i32
  }
  func.func @transform_3(%arg0: i32) -> (i32, i32) {
    %c0_i32 = arith.constant 0 : i32
    %c0_i32_0 = arith.constant 0 : i32
    %c0_i32_1 = arith.constant 0 : i32
    return %c0_i32, %c0_i32_0 : i32, i32
  }
  func.func @transform_4(%arg0: i32) -> (i32, i32) {
    %c0_i32 = arith.constant 0 : i32
    %c0_i32_0 = arith.constant 0 : i32
    %c0_i32_1 = arith.constant 0 : i32
    return %c0_i32, %c0_i32_0 : i32, i32
  }
  func.func @transform_5(%arg0: i32) -> (i32, i32) {
    %c0_i32 = arith.constant 0 : i32
    %c0_i32_0 = arith.constant 0 : i32
    %c0_i32_1 = arith.constant 0 : i32
    return %c0_i32, %c0_i32_0 : i32, i32
  }
  func.func @transform_6(%arg0: i32) -> (i32, i32) {
    %c0_i32 = arith.constant 0 : i32
    %c0_i32_0 = arith.constant 0 : i32
    %c0_i32_1 = arith.constant 0 : i32
    return %c0_i32, %c0_i32_0 : i32, i32
  }
  func.func @transform_7(%arg0: i32) -> (i32, i32) {
    %c0_i32 = arith.constant 0 : i32
    %c0_i32_0 = arith.constant 0 : i32
    return %arg0, %c0_i32 : i32, i32
  }
}

</mosaic_0001>

<llo_original>
// kernel: tpu_custom_call.1
$region0: #{tpu_custom_call.1}
  #allocation0 [shape = 'u32[]', space=smem, size = 0x4, offset = 0x4, fixed_abs, tag = 'smem constant byte address 0x4 - core index']
  #allocation1 [shape = 'u32[144,128]{1,0:T(1,128)}', space=vmem, size = 0x12000, scoped, tag = 'internal scratch']
  %s0 = inlined_call_operand.vmem [shape: f32[2,256], index: 0, kind: input, shape index: {}]
  %s1 = inlined_call_operand.vmem [shape: f32[256,64], index: 1, kind: input, shape index: {}]
  %s2 = inlined_call_operand.vmem [shape: f32[1,64], index: 2, kind: input, shape index: {}]
  %s3 = inlined_call_operand.vmem [shape: f32[64,64], index: 3, kind: input, shape index: {}]
  %s4 = inlined_call_operand.vmem [shape: f32[1,64], index: 4, kind: input, shape index: {}]
  %s5 = inlined_call_operand.vmem [shape: f32[64,128], index: 5, kind: input, shape index: {}]
  %s6 = inlined_call_operand.vmem [shape: f32[1,128], index: 6, kind: input, shape index: {}]
  %s7 = inlined_call_operand.hbm [shape: f32[2,128], index: 7, kind: output, shape index: {}]
  %s8 = sld [smem:[#allocation0]]
  $region38: #{tpu_custom_call.1} parent=0
    _
  %s10 = ssub.s32 1, %s8
  %s11 = scalar_select 0, %s10, %s8
  $region1: #{tpu_custom_call.1} parent=0
    #allocation2 [shape = 'u8[4096]{0}', space=vmem, size = 0x1000, scoped, tag = 'output window, operand 0, single buffered']
    #allocation3 [shape = 's32[1]{0}', space=sflag, size = 0x4, scoped, tag = 'scoped memory for tpu_custom_call.1']
    %12 = vsyncpa [#allocation3], 0
    // Predicated region
    $region2: #{tpu_custom_call.1} parent=1 // pred_check
      _
    $region3: #{tpu_custom_call.1} parent=1 // pred_check_branch
      %14 = sbr.rel (0) target = $region5
    $region4: #{tpu_custom_call.1} parent=1 // pred_region
      _
    $region5: #{tpu_custom_call.1} parent=1 // pred_fallthru
      _
    // Predicated region
    $region6: #{tpu_custom_call.1} parent=1 // pred_check
      _
    $region7: #{tpu_custom_call.1} parent=1 // pred_check_branch
      %16 = sbr.rel (0) target = $region9
    $region8: #{tpu_custom_call.1} parent=1 // pred_region
      _
    $region9: #{tpu_custom_call.1} parent=1 // pred_fallthru
      _
    // Predicated region
    $region10: #{tpu_custom_call.1} parent=1 // pred_check
      _
    $region11: #{tpu_custom_call.1} parent=1 // pred_check_branch
      %18 = sbr.rel (0) target = $region13
    $region12: #{tpu_custom_call.1} parent=1 // pred_region
      _
    $region13: #{tpu_custom_call.1} parent=1 // pred_fallthru
      _
    // Predicated region
    $region14: #{tpu_custom_call.1} parent=1 // pred_check
      _
    $region15: #{tpu_custom_call.1} parent=1 // pred_check_branch
      %20 = sbr.rel (0) target = $region17
    $region16: #{tpu_custom_call.1} parent=1 // pred_region
      _
    $region17: #{tpu_custom_call.1} parent=1 // pred_fallthru
      _
    // Predicated region
    $region18: #{tpu_custom_call.1} parent=1 // pred_check
      _
    $region19: #{tpu_custom_call.1} parent=1 // pred_check_branch
      %22 = sbr.rel (0) target = $region21
    $region20: #{tpu_custom_call.1} parent=1 // pred_region
      _
    $region21: #{tpu_custom_call.1} parent=1 // pred_fallthru
      _
    // Predicated region
    $region22: #{tpu_custom_call.1} parent=1 // pred_check
      _
    $region23: #{tpu_custom_call.1} parent=1 // pred_check_branch
      %24 = sbr.rel (0) target = $region25
    $region24: #{tpu_custom_call.1} parent=1 // pred_region
      _
    $region25: #{tpu_custom_call.1} parent=1 // pred_fallthru
      _
    // Predicated region
    $region26: #{tpu_custom_call.1} parent=1 // pred_check
      _
    $region27: #{tpu_custom_call.1} parent=1 // pred_check_branch
      %26 = sbr.rel (0) target = $region29
    $region28: #{tpu_custom_call.1} parent=1 // pred_region
      _
    $region29: #{tpu_custom_call.1} parent=1 // pred_fallthru
      _
    %v27 = vld [vmem:[%s0] sm:$0xf]
    %v28 = vld [vmem:[%s0 + $0x4] sm:$0xf]
    %v29 = vld [vmem:[%s0 + $0x8] sm:$0xf]
    %v30 = vld [vmem:[%s0 + $0xc] sm:$0xf]
    %v31 = vld [vmem:[%s1] sm:$0xff]
    %v32 = vld [vmem:[%s1 + $0x8] sm:$0xff]
    %v33 = vld [vmem:[%s1 + $0x10] sm:$0xff]
    %v34 = vld [vmem:[%s1 + $0x18] sm:$0xff]
    %v35 = vld [vmem:[%s1 + $0x20] sm:$0xff]
    %v36 = vld [vmem:[%s1 + $0x28] sm:$0xff]
    %v37 = vld [vmem:[%s1 + $0x30] sm:$0xff]
    %v38 = vld [vmem:[%s1 + $0x38] sm:$0xff]
    %v39 = vld [vmem:[%s1 + $0x40] sm:$0xff]
    %v40 = vld [vmem:[%s1 + $0x48] sm:$0xff]
    %v41 = vld [vmem:[%s1 + $0x50] sm:$0xff]
    %v42 = vld [vmem:[%s1 + $0x58] sm:$0xff]
    %v43 = vld [vmem:[%s1 + $0x60] sm:$0xff]
    %v44 = vld [vmem:[%s1 + $0x68] sm:$0xff]
    %v45 = vld [vmem:[%s1 + $0x70] sm:$0xff]
    %v46 = vld [vmem:[%s1 + $0x78] sm:$0xff]
    %v47 = vld [vmem:[%s1 + $0x80] sm:$0xff]
    %v48 = vld [vmem:[%s1 + $0x88] sm:$0xff]
    %v49 = vld [vmem:[%s1 + $0x90] sm:$0xff]
    %v50 = vld [vmem:[%s1 + $0x98] sm:$0xff]
    %v51 = vld [vmem:[%s1 + $0xa0] sm:$0xff]
    %v52 = vld [vmem:[%s1 + $0xa8] sm:$0xff]
    %v53 = vld [vmem:[%s1 + $0xb0] sm:$0xff]
    %v54 = vld [vmem:[%s1 + $0xb8] sm:$0xff]
    %v55 = vld [vmem:[%s1 + $0xc0] sm:$0xff]
    %v56 = vld [vmem:[%s1 + $0xc8] sm:$0xff]
    %v57 = vld [vmem:[%s1 + $0xd0] sm:$0xff]
    %v58 = vld [vmem:[%s1 + $0xd8] sm:$0xff]
    %v59 = vld [vmem:[%s1 + $0xe0] sm:$0xff]
    %v60 = vld [vmem:[%s1 + $0xe8] sm:$0xff]
    %v61 = vld [vmem:[%s1 + $0xf0] sm:$0xff]
    %v62 = vld [vmem:[%s1 + $0xf8] sm:$0xff]
    %v63 = vld [vmem:[%s2] sm:$0x1]
    %v65 = vlaneseq
    %v66 = vshrl.u32 %v65, 7
    %v67 = vsub.s32 0, %v66
    %v68 = vrot.slane %v63, %v67
    %v74 = vcombine.low %v27, %v28
    %v75 = vcombine.low %v29, %v30
    %v77 = vunpack.c.l.s4 1983009808
    %v78 = vunpack.c.0.s8 %v77
    %v79 = vlaneseq
    %v80 = vshrl.u32 %v79, 7
    %v81 = vsub.s32 %v78, %v80
    %v82 = vrot.slane %v74, %v81
    %v84 = vunpack.c.l.s4 1983009808
    %v85 = vunpack.c.0.s8 %v84
    %v86 = vlaneseq
    %v87 = vshrl.u32 %v86, 7
    %v88 = vsub.s32 %v85, %v87
    %v89 = vrot.slane %v75, %v88
    %v90 = vcombine.low %v82, %v89
    %v91 = vcombine.high %v82, %v89
    %94 = vmatprep.subr.mxu0 0.0
    %95 = vmatpush1.msra.mxu0 %v31
    %96 = vmatprep.subr.mxu0 0.0
    %97 = vmatpush1.msra.mxu0 %v32
    %98 = vmatprep.subr.mxu0 0.0
    %99 = vmatpush1.msra.mxu0 %v33
    %100 = vmatprep.subr.mxu0 0.0
    %101 = vmatpush1.msra.mxu0 %v34
    %102 = vmatprep.subr.mxu0 0.0
    %103 = vmatpush1.msra.mxu0 %v35
    %104 = vmatprep.subr.mxu0 0.0
    %105 = vmatpush1.msra.mxu0 %v36
    %106 = vmatprep.subr.mxu0 0.0
    %107 = vmatpush1.msra.mxu0 %v37
    %108 = vmatprep.subr.mxu0 0.0
    %109 = vmatpush1.msra.mxu0 %v38
    %110 = vmatprep.subr.mxu0 0.0
    %111 = vmatpush1.msra.mxu0 %v39
    %112 = vmatprep.subr.mxu0 0.0
    %113 = vmatpush1.msra.mxu0 %v40
    %114 = vmatprep.subr.mxu0 0.0
    %115 = vmatpush1.msra.mxu0 %v41
    %116 = vmatprep.subr.mxu0 0.0
    %117 = vmatpush1.msra.mxu0 %v42
    %118 = vmatprep.subr.mxu0 0.0
    %119 = vmatpush1.msra.mxu0 %v43
    %120 = vmatprep.subr.mxu0 0.0
    %121 = vmatpush1.msra.mxu0 %v44
    %122 = vmatprep.subr.mxu0 0.0
    %123 = vmatpush1.msra.mxu0 %v45
    %124 = vmatprep.subr.mxu0 0.0
    %125 = vmatpush1.msra.mxu0 %v46
    %126 = vmatprep.subr.mxu0 0.0
    %127 = vmatpush1.msra.mxu0 %v47
    %128 = vmatprep.subr.mxu0 0.0
    %129 = vmatpush1.msra.mxu0 %v48
    %130 = vmatprep.subr.mxu0 0.0
    %131 = vmatpush1.msra.mxu0 %v49
    %132 = vmatprep.subr.mxu0 0.0
    %133 = vmatpush1.msra.mxu0 %v50
    %134 = vmatprep.subr.mxu0 0.0
    %135 = vmatpush1.msra.mxu0 %v51
    %136 = vmatprep.subr.mxu0 0.0
    %137 = vmatpush1.msra.mxu0 %v52
    %138 = vmatprep.subr.mxu0 0.0
    %139 = vmatpush1.msra.mxu0 %v53
    %140 = vmatprep.subr.mxu0 0.0
    %141 = vmatpush1.msra.mxu0 %v54
    %142 = vmatprep.subr.mxu0 0.0
    %143 = vmatpush1.msra.mxu0 %v55
    %144 = vmatprep.subr.mxu0 0.0
    %145 = vmatpush1.msra.mxu0 %v56
    %146 = vmatprep.subr.mxu0 0.0
    %147 = vmatpush1.msra.mxu0 %v57
    %148 = vmatprep.subr.mxu0 0.0
    %149 = vmatpush1.msra.mxu0 %v58
    %150 = vmatprep.subr.mxu0 0.0
    %151 = vmatpush1.msra.mxu0 %v59
    %152 = vmatprep.subr.mxu0 0.0
    %153 = vmatpush1.msra.mxu0 %v60
    %154 = vmatprep.subr.mxu0 0.0
    %155 = vmatpush1.msra.mxu0 %v61
    %156 = vmatprep.subr.mxu0 0.0
    %157 = vmatpush1.msra.mxu0 %v62
    %158 = vmatprep.mubr.f32.mxu0 %v91
    %159 = vmatmul.mubr.f32.gmra.mrb[0].mxu0 %v90
    %v160 = vpop.f32.mrb[0].mxu0
    %v161 = vadd.f32 %v68, %v160
    %v162 = vpop.f32.mrb[0].mxu0
    %163 = vdwg.mxu0
    %v164 = vmax.f32 %v161, 0.0
    %v165 = vld [vmem:[%s3] sm:$0xff]
    %v166 = vld [vmem:[%s3 + $0x8] sm:$0xff]
    %v167 = vld [vmem:[%s3 + $0x10] sm:$0xff]
    %v168 = vld [vmem:[%s3 + $0x18] sm:$0xff]
    %v169 = vld [vmem:[%s3 + $0x20] sm:$0xff]
    %v170 = vld [vmem:[%s3 + $0x28] sm:$0xff]
    %v171 = vld [vmem:[%s3 + $0x30] sm:$0xff]
    %v172 = vld [vmem:[%s3 + $0x38] sm:$0xff]
    %v173 = vld [vmem:[%s4] sm:$0x1]
    %v175 = vlaneseq
    %v176 = vshrl.u32 %v175, 7
    %v177 = vsub.s32 0, %v176
    %v178 = vrot.slane %v173, %v177
    %vm180 = vcmask 523264
    %v182 = vsel %vm180, %v164, 0
    %184 = vmatprep.subr.mxu0 0.0
    %185 = vmatpush1.msra.mxu0 %v165
    %186 = vmatprep.subr.mxu0 0.0
    %187 = vmatpush1.msra.mxu0 %v166
    %188 = vmatprep.subr.mxu0 0.0
    %189 = vmatpush1.msra.mxu0 %v167
    %190 = vmatprep.subr.mxu0 0.0
    %191 = vmatpush1.msra.mxu0 %v168
    %192 = vmatprep.subr.mxu0 0.0
    %193 = vmatpush1.msra.mxu0 %v169
    %194 = vmatprep.subr.mxu0 0.0
    %195 = vmatpush1.msra.mxu0 %v170
    %196 = vmatprep.subr.mxu0 0.0
    %197 = vmatpush1.msra.mxu0 %v171
    %198 = vmatprep.subr.mxu0 0.0
    %199 = vmatpush1.msra.mxu0 %v172
    %200 = vmatprep.subr.mxu0 0.0
    %201 = vmatpush1.msra.mxu0 0.0
    %202 = vmatprep.subr.mxu0 0.0
    %203 = vmatpush1.msra.mxu0 0.0
    %204 = vmatprep.subr.mxu0 0.0
    %205 = vmatpush1.msra.mxu0 0.0
    %206 = vmatprep.subr.mxu0 0.0
    %207 = vmatpush1.msra.mxu0 0.0
    %208 = vmatprep.subr.mxu0 0.0
    %209 = vmatpush1.msra.mxu0 0.0
    %210 = vmatprep.subr.mxu0 0.0
    %211 = vmatpush1.msra.mxu0 0.0
    %212 = vmatprep.subr.mxu0 0.0
    %213 = vmatpush1.msra.mxu0 0.0
    %214 = vmatprep.subr.mxu0 0.0
    %215 = vmatpush1.msra.mxu0 0.0
    %216 = vmatprep.subr.mxu0 0.0
    %217 = vmatpush1.msra.mxu0 0.0
    %218 = vmatprep.subr.mxu0 0.0
    %219 = vmatpush1.msra.mxu0 0.0
    %220 = vmatprep.subr.mxu0 0.0
    %221 = vmatpush1.msra.mxu0 0.0
    %222 = vmatprep.subr.mxu0 0.0
    %223 = vmatpush1.msra.mxu0 0.0
    %224 = vmatprep.subr.mxu0 0.0
    %225 = vmatpush1.msra.mxu0 0.0
    %226 = vmatprep.subr.mxu0 0.0
    %227 = vmatpush1.msra.mxu0 0.0
    %228 = vmatprep.subr.mxu0 0.0
    %229 = vmatpush1.msra.mxu0 0.0
    %230 = vmatprep.subr.mxu0 0.0
    %231 = vmatpush1.msra.mxu0 0.0
    %232 = vmatprep.subr.mxu0 0.0
    %233 = vmatpush1.msra.mxu0 0.0
    %234 = vmatprep.subr.mxu0 0.0
    %235 = vmatpush1.msra.mxu0 0.0
    %236 = vmatprep.subr.mxu0 0.0
    %237 = vmatpush1.msra.mxu0 0.0
    %238 = vmatprep.subr.mxu0 0.0
    %239 = vmatpush1.msra.mxu0 0.0
    %240 = vmatprep.subr.mxu0 0.0
    %241 = vmatpush1.msra.mxu0 0.0
    %242 = vmatprep.subr.mxu0 0.0
    %243 = vmatpush1.msra.mxu0 0.0
    %244 = vmatprep.subr.mxu0 0.0
    %245 = vmatpush1.msra.mxu0 0.0
    %246 = vmatprep.subr.mxu0 0.0
    %247 = vmatpush1.msra.mxu0 0.0
    %248 = vmatprep.mubr.f32.mxu0 0.0
    %249 = vmatmul.mubr.f32.gmra.mrb[0].mxu0 %v182
    %v250 = vpop.f32.mrb[0].mxu0
    %v251 = vadd.f32 %v178, %v250
    %v252 = vpop.f32.mrb[0].mxu0
    %253 = vdwg.mxu0
    %v254 = vmax.f32 %v251, 0.0
    %v255 = vld [vmem:[%s5] sm:$0xff]
    %v256 = vld [vmem:[%s5 + $0x8] sm:$0xff]
    %v257 = vld [vmem:[%s5 + $0x10] sm:$0xff]
    %v258 = vld [vmem:[%s5 + $0x18] sm:$0xff]
    %v259 = vld [vmem:[%s5 + $0x20] sm:$0xff]
    %v260 = vld [vmem:[%s5 + $0x28] sm:$0xff]
    %v261 = vld [vmem:[%s5 + $0x30] sm:$0xff]
    %v262 = vld [vmem:[%s5 + $0x38] sm:$0xff]
    %v263 = vld [vmem:[%s6] sm:$0x1]
    %v265 = vlaneseq
    %v266 = vshrl.u32 %v265, 7
    %v267 = vsub.s32 0, %v266
    %v268 = vrot.slane %v263, %v267
    %v271 = vsel %vm180, %v254, 0
    %273 = vmatprep.subr.mxu0 0.0
    %274 = vmatpush1.msra.mxu0 %v255
    %275 = vmatprep.subr.mxu0 0.0
    %276 = vmatpush1.msra.mxu0 %v256
    %277 = vmatprep.subr.mxu0 0.0
    %278 = vmatpush1.msra.mxu0 %v257
    %279 = vmatprep.subr.mxu0 0.0
    %280 = vmatpush1.msra.mxu0 %v258
    %281 = vmatprep.subr.mxu0 0.0
    %282 = vmatpush1.msra.mxu0 %v259
    %283 = vmatprep.subr.mxu0 0.0
    %284 = vmatpush1.msra.mxu0 %v260
    %285 = vmatprep.subr.mxu0 0.0
    %286 = vmatpush1.msra.mxu0 %v261
    %287 = vmatprep.subr.mxu0 0.0
    %288 = vmatpush1.msra.mxu0 %v262
    %289 = vmatprep.subr.mxu0 0.0
    %290 = vmatpush1.msra.mxu0 0.0
    %291 = vmatprep.subr.mxu0 0.0
    %292 = vmatpush1.msra.mxu0 0.0
    %293 = vmatprep.subr.mxu0 0.0
    %294 = vmatpush1.msra.mxu0 0.0
    %295 = vmatprep.subr.mxu0 0.0
    %296 = vmatpush1.msra.mxu0 0.0
    %297 = vmatprep.subr.mxu0 0.0
    %298 = vmatpush1.msra.mxu0 0.0
    %299 = vmatprep.subr.mxu0 0.0
    %300 = vmatpush1.msra.mxu0 0.0
    %301 = vmatprep.subr.mxu0 0.0
    %302 = vmatpush1.msra.mxu0 0.0
    %303 = vmatprep.subr.mxu0 0.0
    %304 = vmatpush1.msra.mxu0 0.0
    %305 = vmatprep.subr.mxu0 0.0
    %306 = vmatpush1.msra.mxu0 0.0
    %307 = vmatprep.subr.mxu0 0.0
    %308 = vmatpush1.msra.mxu0 0.0
    %309 = vmatprep.subr.mxu0 0.0
    %310 = vmatpush1.msra.mxu0 0.0
    %311 = vmatprep.subr.mxu0 0.0
    %312 = vmatpush1.msra.mxu0 0.0
    %313 = vmatprep.subr.mxu0 0.0
    %314 = vmatpush1.msra.mxu0 0.0
    %315 = vmatprep.subr.mxu0 0.0
    %316 = vmatpush1.msra.mxu0 0.0
    %317 = vmatprep.subr.mxu0 0.0
    %318 = vmatpush1.msra.mxu0 0.0
    %319 = vmatprep.subr.mxu0 0.0
    %320 = vmatpush1.msra.mxu0 0.0
    %321 = vmatprep.subr.mxu0 0.0
    %322 = vmatpush1.msra.mxu0 0.0
    %323 = vmatprep.subr.mxu0 0.0
    %324 = vmatpush1.msra.mxu0 0.0
    %325 = vmatprep.subr.mxu0 0.0
    %326 = vmatpush1.msra.mxu0 0.0
    %327 = vmatprep.subr.mxu0 0.0
    %328 = vmatpush1.msra.mxu0 0.0
    %329 = vmatprep.subr.mxu0 0.0
    %330 = vmatpush1.msra.mxu0 0.0
    %331 = vmatprep.subr.mxu0 0.0
    %332 = vmatpush1.msra.mxu0 0.0
    %333 = vmatprep.subr.mxu0 0.0
    %334 = vmatpush1.msra.mxu0 0.0
    %335 = vmatprep.subr.mxu0 0.0
    %336 = vmatpush1.msra.mxu0 0.0
    %337 = vmatprep.mubr.f32.mxu0 0.0
    %338 = vmatmul.mubr.f32.gmra.mrb[0].mxu0 %v271
    %v339 = vpop.f32.mrb[0].mxu0
    %v340 = vadd.f32 %v268, %v339
    %v341 = vpop.f32.mrb[0].mxu0
    %342 = vdwg.mxu0
    %343 = vst [vmem:[#allocation2] sm:$0xff] %v340
    // Predicated region
    $region30: #{tpu_custom_call.1} parent=1 // pred_check
      _
    $region31: #{tpu_custom_call.1} parent=1 // pred_check_branch
      %345 = sbr.rel (0) target = $region33
    $region32: #{tpu_custom_call.1} parent=1 // pred_region
      %s347 = ssub.s32 128, 32
      %348 = vsyncadd [#allocation3], %s347
      %s349 = sshll.u32 [#allocation2], 4
      %s350 = int_to_ptr.vmem [resolvable:$true] %s349
      %355 = dma.vmem_to_hbm [thread:$0]  %s350, 32, %s7, [#allocation3], 32, 32, 2
    $region33: #{tpu_custom_call.1} parent=1 // pred_fallthru
      _
    // Predicated region
    $region34: #{tpu_custom_call.1} parent=1 // pred_check
      _
    $region35: #{tpu_custom_call.1} parent=1 // pred_check_branch
      %357 = sbr.rel (0) target = $region37
    $region36: #{tpu_custom_call.1} parent=1 // pred_region
      %358 = dma.done [#allocation3], 128
    $region37: #{tpu_custom_call.1} parent=1 // pred_fallthru
      _
    %359 = vsyncpa [#allocation3], 1

</llo_original>
